<compile_context>
chip_gen: v5e
topology: v5e:2x2
jax: 0.10.0
libtpu: 0.0.40
codegen_flags: <defaults>
</compile_context>

<pallas_src>
import math
import functools

import jax
import jax.numpy as jnp
from jax import lax
from jax.experimental import pallas as pl
from jax.experimental.pallas import tpu as pltpu


def _mha_kernel(q_ref, k_ref, v_ref,
                wq_ref, wk_ref, wv_ref, wo_ref,
                bq_ref, bk_ref, bv_ref, bo_ref,
                o_ref,
                kproj_ref, vproj_ref, ctx_ref,
                *, n_heads: int, d_k: int):
    """Grid = (batch, query_tile). K/V projections cached in VMEM scratch per batch."""
    qt = pl.program_id(1)

    # K/V projections are shared by every query tile of this batch element.
    # Safe only because the qt axis is innermost and "arbitrary" (sequential per core).
    @pl.when(qt == 0)
    def _project_kv():
        kproj_ref[...] = (jnp.dot(k_ref[0], wk_ref[...],
                                  preferred_element_type=jnp.float32)
                          + bk_ref[...]).astype(jnp.bfloat16)        # (S, D)
        vproj_ref[...] = (jnp.dot(v_ref[0], wv_ref[...],
                                  preferred_element_type=jnp.float32)
                          + bv_ref[...]).astype(jnp.bfloat16)        # (S, D)

    # Q projection for this tile. wq/bq already carry the 1/sqrt(d_k) factor.
    q_proj = (jnp.dot(q_ref[0], wq_ref[...], preferred_element_type=jnp.float32)
              + bq_ref[...]).astype(jnp.bfloat16)                    # (TQ, D)
    k_proj = kproj_ref[...]                                          # (S, D) bf16
    v_proj = vproj_ref[...]                                          # (S, D) bf16

    contract_last = (((1,), (1,)), ((), ()))   # contract last dims, no batch dims

    # n_heads is a small static constant -> static Python loop, static lane slices.
    for h in range(n_heads):
        lo = h * d_k
        qh = q_proj[:, lo:lo + d_k]                                  # (TQ, d_k)
        kh = k_proj[:, lo:lo + d_k]                                  # (S,  d_k)
        vh = v_proj[:, lo:lo + d_k]                                  # (S,  d_k)

        # scores = (Qh / sqrt(d_k)) @ Kh^T without materializing the transpose.
        s = lax.dot_general(qh, kh, contract_last,
                            preferred_element_type=jnp.float32)      # (TQ, S) f32
        # numerically-stable softmax (f32; EUP reciprocal).
        s = s - jnp.max(s, axis=-1, keepdims=True)
        p = jnp.exp(s)
        attn = (p * pl.reciprocal(jnp.sum(p, axis=-1, keepdims=True),
                                  approx=True)).astype(jnp.bfloat16)

        head = jnp.dot(attn, vh, preferred_element_type=jnp.float32)  # (TQ, d_k)
        # Store the head context at its static lane offset; W_o applied once below.
        ctx_ref[:, lo:lo + d_k] = head.astype(jnp.bfloat16)

    # Single full-depth (K = D) output projection on the MXU.
    out = (jnp.dot(ctx_ref[...], wo_ref[...], preferred_element_type=jnp.float32)
           + bo_ref[...])                                            # (TQ, D) f32
    o_ref[...] = out[None, :, :].astype(o_ref.dtype)

    # TODO(synk): optional `mask` argument of the PyTorch forward is not wired
    # through (mask=None path implemented). For very large S the full-S K/V blocks
    # and (TQ,S) score tiles stop fitting VMEM; switch to a TK-tiled online-softmax
    # (flash) accumulation gated on the VMEM estimate.


def _vmem_capacity_bytes() -> int:
    """Per-core VMEM capacity; fall back to the smallest (v7x) if unqueryable."""
    try:
        return int(pltpu.get_tpu_info().vmem_capacity_bytes)
    except Exception:
        return 64 << 20


def _pick_q_tile(s: int, cap: int) -> int:
    """Largest divisor of S that is <= cap and a multiple of 8; else full S."""
    cap = min(cap, s)
    for t in range(cap - cap % 8, 0, -8):
        if s % t == 0:
            return t
    return s  # full-extent block is always legal


def _vmem_limit_bytes(S, TQ, D, n_heads, d_k, vmem_cap):
    """Buffer budget incl. single-buffered specs and f32 softmax temporaries."""
    f32, bf16 = 4, 2
    est = 0
    est += 2 * TQ * D * bf16          # q block (double-buffered, bf16)
    est += 2 * TQ * D * f32           # out block (double-buffered, f32)
    est += 2 * S * D * bf16           # k + v blocks (single-buffered, bf16)
    est += 4 * D * D * bf16           # wq/wk/wv/wo (single-buffered)
    est += 4 * D * f32                # biases
    est += 2 * S * D * bf16           # kproj / vproj scratch
    est += TQ * D * bf16              # ctx scratch
    est += 4 * TQ * S * f32           # live f32 score / softmax temporaries
    est += n_heads * TQ * d_k * f32   # per-head f32 contexts before bf16 store
    est = int(1.25 * est) + (4 << 20)  # relayout / compiler-internal headroom
    hi = int(0.75 * vmem_cap)          # ~48 MiB on v7x, ~96 MiB on v5e/v6e
    return max(16 << 20, min(est, hi))


def multi_head_attention(query, key, value, params, *, n_heads: int):
    """query/key/value: [B, S, D] float32. params: dict of f32 weights/biases."""
    B, S, D = query.shape
    d_k = D // n_heads
    assert d_k * n_heads == D

    vmem_cap = _vmem_capacity_bytes()
    tq_cap = 512 if vmem_cap >= (96 << 20) else 256   # v5e/v6e vs v7x
    TQ = _pick_q_tile(S, tq_cap)
    n_qt = pl.cdiv(S, TQ)

    scale = 1.0 / math.sqrt(d_k)
    # bf16 weights: native MXU rate + halved resident weight footprint.
    wq = (params["wq"] * scale).astype(jnp.bfloat16)   # scale folded into W_q / b_q
    bq = (params["bq"] * scale).astype(jnp.float32)
    wk = params["wk"].astype(jnp.bfloat16)
    wv = params["wv"].astype(jnp.bfloat16)
    wo = params["wo"].astype(jnp.bfloat16)

    # bf16 activations at the boundary: halves K/V input-block VMEM and DMA bytes.
    q_bf = query.astype(jnp.bfloat16)
    k_bf = key.astype(jnp.bfloat16)
    v_bf = value.astype(jnp.bfloat16)

    kernel = functools.partial(_mha_kernel, n_heads=n_heads, d_k=d_k)

    q_spec = pl.BlockSpec((1, TQ, D), lambda b, t: (b, t, 0))
    o_spec = pl.BlockSpec((1, TQ, D), lambda b, t: (b, t, 0))
    # Blocks whose index is constant across the qt axis (or fully constant):
    # single-buffer them — the second pipeline buffer was pure VMEM waste.
    kv_spec = pl.BlockSpec((1, S, D), lambda b, t: (b, 0, 0),
                           pipeline_mode=pl.Buffered(1))
    w_spec = pl.BlockSpec((D, D), lambda b, t: (0, 0),
                          pipeline_mode=pl.Buffered(1))
    b_spec = pl.BlockSpec((1, D), lambda b, t: (0, 0),
                          pipeline_mode=pl.Buffered(1))

    return pl.pallas_call(
        kernel,
        out_shape=jax.ShapeDtypeStruct((B, S, D), jnp.float32),
        grid_spec=pltpu.PrefetchScalarGridSpec(
            num_scalar_prefetch=0,
            grid=(B, n_qt),
            in_specs=[q_spec, kv_spec, kv_spec,
                      w_spec, w_spec, w_spec, w_spec,
                      b_spec, b_spec, b_spec, b_spec],
            out_specs=o_spec,
            scratch_shapes=[pltpu.VMEM((S, D), jnp.bfloat16),    # K projection cache
                            pltpu.VMEM((S, D), jnp.bfloat16),    # V projection cache
                            pltpu.VMEM((TQ, D), jnp.bfloat16)],  # per-head context slab
        ),
        # qt axis MUST stay "arbitrary": the K/V projection scratch carries across it.
        # TODO(synk): for B == 1 on v7x (2 TCs) one core idles; split the qt range
        # across cores (duplicating the per-core K/V projection) if that matters.
        compiler_params=pltpu.CompilerParams(
            dimension_semantics=("parallel", "arbitrary"),
            vmem_limit_bytes=_vmem_limit_bytes(S, TQ, D, n_heads, d_k, vmem_cap)),
    )(q_bf, k_bf, v_bf, wq, wk, wv, wo,
      bq, params["bk"], params["bv"], params["bo"])


def _reference_mha(q, k, v, params, n_heads):
    """Pure-JAX f32 reference mirroring the PyTorch forward exactly (mask=None)."""
    B, S, D = q.shape
    d_k = D // n_heads

    def lin(x, w, b):
        return x @ w + b  # w already (D_in, D_out)

    Q = lin(q, params["wq"], params["bq"]).reshape(B, S, n_heads, d_k).transpose(0, 2, 1, 3)
    K = lin(k, params["wk"], params["bk"]).reshape(B, S, n_heads, d_k).transpose(0, 2, 1, 3)
    V = lin(v, params["wv"], params["bv"]).reshape(B, S, n_heads, d_k).transpose(0, 2, 1, 3)
    scores = jnp.einsum("bhqd,bhkd->bhqk", Q, K) / math.sqrt(d_k)
    attn = jax.nn.softmax(scores, axis=-1)
    ctx = jnp.einsum("bhqk,bhkd->bhqd", attn, V).transpose(0, 2, 1, 3).reshape(B, S, D)
    return lin(ctx, params["wo"], params["bo"])


def init_params(key, d_model):
    """Deterministic init mimicking nn.Linear (uniform(-1/sqrt(fan_in), +))."""
    bound = 1.0 / math.sqrt(d_model)
    names = ["wq", "wk", "wv", "wo", "bq", "bk", "bv", "bo"]
    keys = jax.random.split(key, len(names))
    params = {}
    for name, k in zip(names, keys):
        shape = (d_model, d_model) if name.startswith("w") else (1, d_model)
        params[name] = jax.random.uniform(k, shape, jnp.float32, -bound, bound)
    return params


if __name__ == "__main__":
    B, S, D, H = 2, 8, 32, 4                     # batch, seq, d_model, n_heads
    root = jax.random.PRNGKey(0)
    kq, kk, kv, kp = jax.random.split(root, 4)

    query = jax.random.normal(kq, (B, S, D), jnp.float32)
    key_in = jax.random.normal(kk, (B, S, D), jnp.float32)
    value = jax.random.normal(kv, (B, S, D), jnp.float32)
    params = init_params(kp, D)

    out = multi_head_attention(query, key_in, value, params, n_heads=H)
    out = jax.block_until_ready(out)

    ref = _reference_mha(query, key_in, value, params, H)
    assert out.shape == (B, S, D)
    # Tolerance loosened vs. the f32 reference: activations/weights are bf16 on the MXU.
    assert jnp.allclose(out, ref, atol=5e-2, rtol=5e-2), "mismatch vs. reference"
    print("KERNEL_OK")
</pallas_src>

<mosaic_0001>
module attributes {stable_mosaic.version = 11 : i64} {
  func.func @_mha_kernel(%arg0: i32, %arg1: i32, %arg2: memref<1x8x32xbf16, #tpu.memory_space<vmem>>, %arg3: memref<1x8x32xbf16, #tpu.memory_space<vmem>>, %arg4: memref<1x8x32xbf16, #tpu.memory_space<vmem>>, %arg5: memref<32x32xbf16, #tpu.memory_space<vmem>>, %arg6: memref<32x32xbf16, #tpu.memory_space<vmem>>, %arg7: memref<32x32xbf16, #tpu.memory_space<vmem>>, %arg8: memref<32x32xbf16, #tpu.memory_space<vmem>>, %arg9: memref<1x32xf32, #tpu.memory_space<vmem>>, %arg10: memref<1x32xf32, #tpu.memory_space<vmem>>, %arg11: memref<1x32xf32, #tpu.memory_space<vmem>>, %arg12: memref<1x32xf32, #tpu.memory_space<vmem>>, %arg13: memref<1x8x32xf32, #tpu.memory_space<vmem>>, %arg14: memref<8x32xbf16, #tpu.memory_space<vmem>>, %arg15: memref<8x32xbf16, #tpu.memory_space<vmem>>, %arg16: memref<8x32xbf16, #tpu.memory_space<vmem>>) attributes {dimension_semantics = [#tpu.dimension_semantics<parallel>, #tpu.dimension_semantics<arbitrary>], iteration_bounds = array<i64: 2, 1>, scalar_prefetch = 0 : i64, scratch_operands = 3 : i64, tpu.core_type = #tpu.core_type<tc>, window_params = [{transform_indices = @transform_0, window_bounds = array<i64: 1, 8, 32>}, {pipeline_mode = #tpu.pipeline_mode<synchronous>, transform_indices = @transform_1, window_bounds = array<i64: 1, 8, 32>}, {pipeline_mode = #tpu.pipeline_mode<synchronous>, transform_indices = @transform_2, window_bounds = array<i64: 1, 8, 32>}, {pipeline_mode = #tpu.pipeline_mode<synchronous>, transform_indices = @transform_3, window_bounds = array<i64: 32, 32>}, {pipeline_mode = #tpu.pipeline_mode<synchronous>, transform_indices = @transform_4, window_bounds = array<i64: 32, 32>}, {pipeline_mode = #tpu.pipeline_mode<synchronous>, transform_indices = @transform_5, window_bounds = array<i64: 32, 32>}, {pipeline_mode = #tpu.pipeline_mode<synchronous>, transform_indices = @transform_6, window_bounds = array<i64: 32, 32>}, {pipeline_mode = #tpu.pipeline_mode<synchronous>, transform_indices = @transform_7, window_bounds = array<i64: 1, 32>}, {pipeline_mode = #tpu.pipeline_mode<synchronous>, transform_indices = @transform_8, window_bounds = array<i64: 1, 32>}, {pipeline_mode = #tpu.pipeline_mode<synchronous>, transform_indices = @transform_9, window_bounds = array<i64: 1, 32>}, {pipeline_mode = #tpu.pipeline_mode<synchronous>, transform_indices = @transform_10, window_bounds = array<i64: 1, 32>}, {transform_indices = @transform_11, window_bounds = array<i64: 1, 8, 32>}]} {
    %c0_i32 = arith.constant 0 : i32
    %0 = arith.cmpi eq, %arg1, %c0_i32 : i32
    %1 = arith.extui %0 : i1 to i32
    %c0_i32_0 = arith.constant 0 : i32
    %2 = arith.cmpi ne, %1, %c0_i32_0 : i32
    scf.if %2 {
      %c0_42 = arith.constant 0 : index
      %c0_43 = arith.constant 0 : index
      %c0_44 = arith.constant 0 : index
      %93 = vector.load %arg3[%c0_42, %c0_43, %c0_44] : memref<1x8x32xbf16, #tpu.memory_space<vmem>>, vector<1x8x32xbf16>
      %94 = vector.shape_cast %93 : vector<1x8x32xbf16> to vector<8x32xbf16>
      %c0_45 = arith.constant 0 : index
      %c0_46 = arith.constant 0 : index
      %95 = vector.load %arg6[%c0_45, %c0_46] : memref<32x32xbf16, #tpu.memory_space<vmem>>, vector<32x32xbf16>
      %cst_47 = arith.constant dense<0.000000e+00> : vector<8x32xf32>
      %96 = tpu.matmul %94, %95, %cst_47 {dimension_numbers = #tpu.dot_dimension_numbers<[1], [0], [0], [1], [0, 0, 1, 1], [], []>} : vector<8x32xbf16>, vector<32x32xbf16>, vector<8x32xf32> -> vector<8x32xf32>
      %c0_48 = arith.constant 0 : index
      %c0_49 = arith.constant 0 : index
      %97 = vector.load %arg10[%c0_48, %c0_49] : memref<1x32xf32, #tpu.memory_space<vmem>>, vector<1x32xf32>
      %98 = vector.broadcast %97 : vector<1x32xf32> to vector<8x32xf32>
      %99 = arith.addf %96, %98 : vector<8x32xf32>
      %100 = arith.truncf %99 : vector<8x32xf32> to vector<8x32xbf16>
      %c0_50 = arith.constant 0 : index
      %c0_51 = arith.constant 0 : index
      %101 = vector.load %arg14[%c0_50, %c0_51] : memref<8x32xbf16, #tpu.memory_space<vmem>>, vector<8x32xbf16>
      tpu.vector_store %arg14[%c0_50, %c0_51], %100 {strides = array<i32>} : memref<8x32xbf16, #tpu.memory_space<vmem>>, vector<8x32xbf16>,
      %c0_52 = arith.constant 0 : index
      %c0_53 = arith.constant 0 : index
      %c0_54 = arith.constant 0 : index
      %102 = vector.load %arg4[%c0_52, %c0_53, %c0_54] : memref<1x8x32xbf16, #tpu.memory_space<vmem>>, vector<1x8x32xbf16>
      %103 = vector.shape_cast %102 : vector<1x8x32xbf16> to vector<8x32xbf16>
      %c0_55 = arith.constant 0 : index
      %c0_56 = arith.constant 0 : index
      %104 = vector.load %arg7[%c0_55, %c0_56] : memref<32x32xbf16, #tpu.memory_space<vmem>>, vector<32x32xbf16>
      %cst_57 = arith.constant dense<0.000000e+00> : vector<8x32xf32>
      %105 = tpu.matmul %103, %104, %cst_57 {dimension_numbers = #tpu.dot_dimension_numbers<[1], [0], [0], [1], [0, 0, 1, 1], [], []>} : vector<8x32xbf16>, vector<32x32xbf16>, vector<8x32xf32> -> vector<8x32xf32>
      %c0_58 = arith.constant 0 : index
      %c0_59 = arith.constant 0 : index
      %106 = vector.load %arg11[%c0_58, %c0_59] : memref<1x32xf32, #tpu.memory_space<vmem>>, vector<1x32xf32>
      %107 = vector.broadcast %106 : vector<1x32xf32> to vector<8x32xf32>
      %108 = arith.addf %105, %107 : vector<8x32xf32>
      %109 = arith.truncf %108 : vector<8x32xf32> to vector<8x32xbf16>
      %c0_60 = arith.constant 0 : index
      %c0_61 = arith.constant 0 : index
      %110 = vector.load %arg15[%c0_60, %c0_61] : memref<8x32xbf16, #tpu.memory_space<vmem>>, vector<8x32xbf16>
      tpu.vector_store %arg15[%c0_60, %c0_61], %109 {strides = array<i32>} : memref<8x32xbf16, #tpu.memory_space<vmem>>, vector<8x32xbf16>,
    } else {
    }
    %c0 = arith.constant 0 : index
    %c0_1 = arith.constant 0 : index
    %c0_2 = arith.constant 0 : index
    %3 = vector.load %arg2[%c0, %c0_1, %c0_2] : memref<1x8x32xbf16, #tpu.memory_space<vmem>>, vector<1x8x32xbf16>
    %4 = vector.shape_cast %3 : vector<1x8x32xbf16> to vector<8x32xbf16>
    %c0_3 = arith.constant 0 : index
    %c0_4 = arith.constant 0 : index
    %5 = vector.load %arg5[%c0_3, %c0_4] : memref<32x32xbf16, #tpu.memory_space<vmem>>, vector<32x32xbf16>
    %cst = arith.constant dense<0.000000e+00> : vector<8x32xf32>
    %6 = tpu.matmul %4, %5, %cst {dimension_numbers = #tpu.dot_dimension_numbers<[1], [0], [0], [1], [0, 0, 1, 1], [], []>} : vector<8x32xbf16>, vector<32x32xbf16>, vector<8x32xf32> -> vector<8x32xf32>
    %c0_5 = arith.constant 0 : index
    %c0_6 = arith.constant 0 : index
    %7 = vector.load %arg9[%c0_5, %c0_6] : memref<1x32xf32, #tpu.memory_space<vmem>>, vector<1x32xf32>
    %8 = vector.broadcast %7 : vector<1x32xf32> to vector<8x32xf32>
    %9 = arith.addf %6, %8 : vector<8x32xf32>
    %10 = arith.truncf %9 : vector<8x32xf32> to vector<8x32xbf16>
    %c0_7 = arith.constant 0 : index
    %c0_8 = arith.constant 0 : index
    %11 = vector.load %arg14[%c0_7, %c0_8] : memref<8x32xbf16, #tpu.memory_space<vmem>>, vector<8x32xbf16>
    %c0_9 = arith.constant 0 : index
    %c0_10 = arith.constant 0 : index
    %12 = vector.load %arg15[%c0_9, %c0_10] : memref<8x32xbf16, #tpu.memory_space<vmem>>, vector<8x32xbf16>
    %13 = vector.extract_strided_slice %10 {offsets = [0, 0], sizes = [8, 8], strides = [1, 1]} : vector<8x32xbf16> to vector<8x8xbf16>
    %14 = vector.extract_strided_slice %11 {offsets = [0, 0], sizes = [8, 8], strides = [1, 1]} : vector<8x32xbf16> to vector<8x8xbf16>
    %15 = vector.extract_strided_slice %12 {offsets = [0, 0], sizes = [8, 8], strides = [1, 1]} : vector<8x32xbf16> to vector<8x8xbf16>
    %cst_11 = arith.constant dense<0.000000e+00> : vector<8x8xf32>
    %16 = tpu.matmul %13, %14, %cst_11 {dimension_numbers = #tpu.dot_dimension_numbers<[1], [1], [0], [0], [0, 0, 1, 0], [], []>} : vector<8x8xbf16>, vector<8x8xbf16>, vector<8x8xf32> -> vector<8x8xf32>
    %cst_12 = arith.constant dense<0xFF800000> : vector<8xf32>
    %17 = vector.multi_reduction <maximumf>, %16, %cst_12 [1] : vector<8x8xf32> to vector<8xf32>
    %18 = vector.shape_cast %17 : vector<8xf32> to vector<8x1xf32>
    %19 = vector.broadcast %18 : vector<8x1xf32> to vector<8x8xf32>
    %20 = arith.subf %16, %19 : vector<8x8xf32>
    %21 = math.exp %20 : vector<8x8xf32>
    %cst_13 = arith.constant dense<0.000000e+00> : vector<8xf32>
    %22 = vector.multi_reduction <add>, %21, %cst_13 [1] : vector<8x8xf32> to vector<8xf32>
    %23 = vector.shape_cast %22 : vector<8xf32> to vector<8x1xf32>
    %24 = tpu.reciprocal %23 {approx = true} : vector<8x1xf32> -> vector<8x1xf32>
    %25 = vector.broadcast %24 : vector<8x1xf32> to vector<8x8xf32>
    %26 = arith.mulf %21, %25 : vector<8x8xf32>
    %27 = arith.truncf %26 : vector<8x8xf32> to vector<8x8xbf16>
    %cst_14 = arith.constant dense<0.000000e+00> : vector<8x8xf32>
    %28 = tpu.matmul %27, %15, %cst_14 {dimension_numbers = #tpu.dot_dimension_numbers<[1], [0], [0], [1], [0, 0, 1, 1], [], []>} : vector<8x8xbf16>, vector<8x8xbf16>, vector<8x8xf32> -> vector<8x8xf32>
    %29 = arith.truncf %28 : vector<8x8xf32> to vector<8x8xbf16>
    %c0_15 = arith.constant 0 : index
    %c0_16 = arith.constant 0 : index
    %30 = vector.load %arg16[%c0_15, %c0_16] : memref<8x32xbf16, #tpu.memory_space<vmem>>, vector<8x8xbf16>
    tpu.vector_store %arg16[%c0_15, %c0_16], %29 {strides = array<i32>} : memref<8x32xbf16, #tpu.memory_space<vmem>>, vector<8x8xbf16>,
    %31 = vector.extract_strided_slice %10 {offsets = [0, 8], sizes = [8, 8], strides = [1, 1]} : vector<8x32xbf16> to vector<8x8xbf16>
    %32 = vector.extract_strided_slice %11 {offsets = [0, 8], sizes = [8, 8], strides = [1, 1]} : vector<8x32xbf16> to vector<8x8xbf16>
    %33 = vector.extract_strided_slice %12 {offsets = [0, 8], sizes = [8, 8], strides = [1, 1]} : vector<8x32xbf16> to vector<8x8xbf16>
    %cst_17 = arith.constant dense<0.000000e+00> : vector<8x8xf32>
    %34 = tpu.matmul %31, %32, %cst_17 {dimension_numbers = #tpu.dot_dimension_numbers<[1], [1], [0], [0], [0, 0, 1, 0], [], []>} : vector<8x8xbf16>, vector<8x8xbf16>, vector<8x8xf32> -> vector<8x8xf32>
    %cst_18 = arith.constant dense<0xFF800000> : vector<8xf32>
    %35 = vector.multi_reduction <maximumf>, %34, %cst_18 [1] : vector<8x8xf32> to vector<8xf32>
    %36 = vector.shape_cast %35 : vector<8xf32> to vector<8x1xf32>
    %37 = vector.broadcast %36 : vector<8x1xf32> to vector<8x8xf32>
    %38 = arith.subf %34, %37 : vector<8x8xf32>
    %39 = math.exp %38 : vector<8x8xf32>
    %cst_19 = arith.constant dense<0.000000e+00> : vector<8xf32>
    %40 = vector.multi_reduction <add>, %39, %cst_19 [1] : vector<8x8xf32> to vector<8xf32>
    %41 = vector.shape_cast %40 : vector<8xf32> to vector<8x1xf32>
    %42 = tpu.reciprocal %41 {approx = true} : vector<8x1xf32> -> vector<8x1xf32>
    %43 = vector.broadcast %42 : vector<8x1xf32> to vector<8x8xf32>
    %44 = arith.mulf %39, %43 : vector<8x8xf32>
    %45 = arith.truncf %44 : vector<8x8xf32> to vector<8x8xbf16>
    %cst_20 = arith.constant dense<0.000000e+00> : vector<8x8xf32>
    %46 = tpu.matmul %45, %33, %cst_20 {dimension_numbers = #tpu.dot_dimension_numbers<[1], [0], [0], [1], [0, 0, 1, 1], [], []>} : vector<8x8xbf16>, vector<8x8xbf16>, vector<8x8xf32> -> vector<8x8xf32>
    %47 = arith.truncf %46 : vector<8x8xf32> to vector<8x8xbf16>
    %c0_21 = arith.constant 0 : index
    %c8 = arith.constant 8 : index
    %48 = vector.load %arg16[%c0_21, %c8] : memref<8x32xbf16, #tpu.memory_space<vmem>>, vector<8x8xbf16>
    tpu.vector_store %arg16[%c0_21, %c8], %47 {strides = array<i32>} : memref<8x32xbf16, #tpu.memory_space<vmem>>, vector<8x8xbf16>,
    %49 = vector.extract_strided_slice %10 {offsets = [0, 16], sizes = [8, 8], strides = [1, 1]} : vector<8x32xbf16> to vector<8x8xbf16>
    %50 = vector.extract_strided_slice %11 {offsets = [0, 16], sizes = [8, 8], strides = [1, 1]} : vector<8x32xbf16> to vector<8x8xbf16>
    %51 = vector.extract_strided_slice %12 {offsets = [0, 16], sizes = [8, 8], strides = [1, 1]} : vector<8x32xbf16> to vector<8x8xbf16>
    %cst_22 = arith.constant dense<0.000000e+00> : vector<8x8xf32>
    %52 = tpu.matmul %49, %50, %cst_22 {dimension_numbers = #tpu.dot_dimension_numbers<[1], [1], [0], [0], [0, 0, 1, 0], [], []>} : vector<8x8xbf16>, vector<8x8xbf16>, vector<8x8xf32> -> vector<8x8xf32>
    %cst_23 = arith.constant dense<0xFF800000> : vector<8xf32>
    %53 = vector.multi_reduction <maximumf>, %52, %cst_23 [1] : vector<8x8xf32> to vector<8xf32>
    %54 = vector.shape_cast %53 : vector<8xf32> to vector<8x1xf32>
    %55 = vector.broadcast %54 : vector<8x1xf32> to vector<8x8xf32>
    %56 = arith.subf %52, %55 : vector<8x8xf32>
    %57 = math.exp %56 : vector<8x8xf32>
    %cst_24 = arith.constant dense<0.000000e+00> : vector<8xf32>
    %58 = vector.multi_reduction <add>, %57, %cst_24 [1] : vector<8x8xf32> to vector<8xf32>
    %59 = vector.shape_cast %58 : vector<8xf32> to vector<8x1xf32>
    %60 = tpu.reciprocal %59 {approx = true} : vector<8x1xf32> -> vector<8x1xf32>
    %61 = vector.broadcast %60 : vector<8x1xf32> to vector<8x8xf32>
    %62 = arith.mulf %57, %61 : vector<8x8xf32>
    %63 = arith.truncf %62 : vector<8x8xf32> to vector<8x8xbf16>
    %cst_25 = arith.constant dense<0.000000e+00> : vector<8x8xf32>
    %64 = tpu.matmul %63, %51, %cst_25 {dimension_numbers = #tpu.dot_dimension_numbers<[1], [0], [0], [1], [0, 0, 1, 1], [], []>} : vector<8x8xbf16>, vector<8x8xbf16>, vector<8x8xf32> -> vector<8x8xf32>
    %65 = arith.truncf %64 : vector<8x8xf32> to vector<8x8xbf16>
    %c0_26 = arith.constant 0 : index
    %c16 = arith.constant 16 : index
    %66 = vector.load %arg16[%c0_26, %c16] : memref<8x32xbf16, #tpu.memory_space<vmem>>, vector<8x8xbf16>
    tpu.vector_store %arg16[%c0_26, %c16], %65 {strides = array<i32>} : memref<8x32xbf16, #tpu.memory_space<vmem>>, vector<8x8xbf16>,
    %67 = vector.extract_strided_slice %10 {offsets = [0, 24], sizes = [8, 8], strides = [1, 1]} : vector<8x32xbf16> to vector<8x8xbf16>
    %68 = vector.extract_strided_slice %11 {offsets = [0, 24], sizes = [8, 8], strides = [1, 1]} : vector<8x32xbf16> to vector<8x8xbf16>
    %69 = vector.extract_strided_slice %12 {offsets = [0, 24], sizes = [8, 8], strides = [1, 1]} : vector<8x32xbf16> to vector<8x8xbf16>
    %cst_27 = arith.constant dense<0.000000e+00> : vector<8x8xf32>
    %70 = tpu.matmul %67, %68, %cst_27 {dimension_numbers = #tpu.dot_dimension_numbers<[1], [1], [0], [0], [0, 0, 1, 0], [], []>} : vector<8x8xbf16>, vector<8x8xbf16>, vector<8x8xf32> -> vector<8x8xf32>
    %cst_28 = arith.constant dense<0xFF800000> : vector<8xf32>
    %71 = vector.multi_reduction <maximumf>, %70, %cst_28 [1] : vector<8x8xf32> to vector<8xf32>
    %72 = vector.shape_cast %71 : vector<8xf32> to vector<8x1xf32>
    %73 = vector.broadcast %72 : vector<8x1xf32> to vector<8x8xf32>
    %74 = arith.subf %70, %73 : vector<8x8xf32>
    %75 = math.exp %74 : vector<8x8xf32>
    %cst_29 = arith.constant dense<0.000000e+00> : vector<8xf32>
    %76 = vector.multi_reduction <add>, %75, %cst_29 [1] : vector<8x8xf32> to vector<8xf32>
    %77 = vector.shape_cast %76 : vector<8xf32> to vector<8x1xf32>
    %78 = tpu.reciprocal %77 {approx = true} : vector<8x1xf32> -> vector<8x1xf32>
    %79 = vector.broadcast %78 : vector<8x1xf32> to vector<8x8xf32>
    %80 = arith.mulf %75, %79 : vector<8x8xf32>
    %81 = arith.truncf %80 : vector<8x8xf32> to vector<8x8xbf16>
    %cst_30 = arith.constant dense<0.000000e+00> : vector<8x8xf32>
    %82 = tpu.matmul %81, %69, %cst_30 {dimension_numbers = #tpu.dot_dimension_numbers<[1], [0], [0], [1], [0, 0, 1, 1], [], []>} : vector<8x8xbf16>, vector<8x8xbf16>, vector<8x8xf32> -> vector<8x8xf32>
    %83 = arith.truncf %82 : vector<8x8xf32> to vector<8x8xbf16>
    %c0_31 = arith.constant 0 : index
    %c24 = arith.constant 24 : index
    %84 = vector.load %arg16[%c0_31, %c24] : memref<8x32xbf16, #tpu.memory_space<vmem>>, vector<8x8xbf16>
    tpu.vector_store %arg16[%c0_31, %c24], %83 {strides = array<i32>} : memref<8x32xbf16, #tpu.memory_space<vmem>>, vector<8x8xbf16>,
    %c0_32 = arith.constant 0 : index
    %c0_33 = arith.constant 0 : index
    %85 = vector.load %arg16[%c0_32, %c0_33] : memref<8x32xbf16, #tpu.memory_space<vmem>>, vector<8x32xbf16>
    %c0_34 = arith.constant 0 : index
    %c0_35 = arith.constant 0 : index
    %86 = vector.load %arg8[%c0_34, %c0_35] : memref<32x32xbf16, #tpu.memory_space<vmem>>, vector<32x32xbf16>
    %cst_36 = arith.constant dense<0.000000e+00> : vector<8x32xf32>
    %87 = tpu.matmul %85, %86, %cst_36 {dimension_numbers = #tpu.dot_dimension_numbers<[1], [0], [0], [1], [0, 0, 1, 1], [], []>} : vector<8x32xbf16>, vector<32x32xbf16>, vector<8x32xf32> -> vector<8x32xf32>
    %c0_37 = arith.constant 0 : index
    %c0_38 = arith.constant 0 : index
    %88 = vector.load %arg12[%c0_37, %c0_38] : memref<1x32xf32, #tpu.memory_space<vmem>>, vector<1x32xf32>
    %89 = vector.broadcast %88 : vector<1x32xf32> to vector<8x32xf32>
    %90 = arith.addf %87, %89 : vector<8x32xf32>
    %91 = vector.shape_cast %90 : vector<8x32xf32> to vector<1x8x32xf32>
    %c0_39 = arith.constant 0 : index
    %c0_40 = arith.constant 0 : index
    %c0_41 = arith.constant 0 : index
    %92 = vector.load %arg13[%c0_39, %c0_40, %c0_41] : memref<1x8x32xf32, #tpu.memory_space<vmem>>, vector<1x8x32xf32>
    tpu.vector_store %arg13[%c0_39, %c0_40, %c0_41], %91 {strides = array<i32>} : memref<1x8x32xf32, #tpu.memory_space<vmem>>, vector<1x8x32xf32>,
    return
  }
  func.func @transform_0(%arg0: i32, %arg1: i32) -> (i32, i32, i32) {
    %c0_i32 = arith.constant 0 : i32
    %c0_i32_0 = arith.constant 0 : i32
    return %arg0, %arg1, %c0_i32 : i32, i32, i32
  }
  func.func @transform_1(%arg0: i32, %arg1: i32) -> (i32, i32, i32) {
    %c0_i32 = arith.constant 0 : i32
    %c0_i32_0 = arith.constant 0 : i32
    %c0_i32_1 = arith.constant 0 : i32
    return %arg0, %c0_i32, %c0_i32_0 : i32, i32, i32
  }
  func.func @transform_2(%arg0: i32, %arg1: i32) -> (i32, i32, i32) {
    %c0_i32 = arith.constant 0 : i32
    %c0_i32_0 = arith.constant 0 : i32
    %c0_i32_1 = arith.constant 0 : i32
    return %arg0, %c0_i32, %c0_i32_0 : i32, i32, i32
  }
  func.func @transform_3(%arg0: i32, %arg1: i32) -> (i32, i32) {
    %c0_i32 = arith.constant 0 : i32
    %c0_i32_0 = arith.constant 0 : i32
    %c0_i32_1 = arith.constant 0 : i32
    return %c0_i32, %c0_i32_0 : i32, i32
  }
  func.func @transform_4(%arg0: i32, %arg1: i32) -> (i32, i32) {
    %c0_i32 = arith.constant 0 : i32
    %c0_i32_0 = arith.constant 0 : i32
    %c0_i32_1 = arith.constant 0 : i32
    return %c0_i32, %c0_i32_0 : i32, i32
  }
  func.func @transform_5(%arg0: i32, %arg1: i32) -> (i32, i32) {
    %c0_i32 = arith.constant 0 : i32
    %c0_i32_0 = arith.constant 0 : i32
    %c0_i32_1 = arith.constant 0 : i32
    return %c0_i32, %c0_i32_0 : i32, i32
  }
  func.func @transform_6(%arg0: i32, %arg1: i32) -> (i32, i32) {
    %c0_i32 = arith.constant 0 : i32
    %c0_i32_0 = arith.constant 0 : i32
    %c0_i32_1 = arith.constant 0 : i32
    return %c0_i32, %c0_i32_0 : i32, i32
  }
  func.func @transform_7(%arg0: i32, %arg1: i32) -> (i32, i32) {
    %c0_i32 = arith.constant 0 : i32
    %c0_i32_0 = arith.constant 0 : i32
    %c0_i32_1 = arith.constant 0 : i32
    return %c0_i32, %c0_i32_0 : i32, i32
  }
  func.func @transform_8(%arg0: i32, %arg1: i32) -> (i32, i32) {
    %c0_i32 = arith.constant 0 : i32
    %c0_i32_0 = arith.constant 0 : i32
    %c0_i32_1 = arith.constant 0 : i32
    return %c0_i32, %c0_i32_0 : i32, i32
  }
  func.func @transform_9(%arg0: i32, %arg1: i32) -> (i32, i32) {
    %c0_i32 = arith.constant 0 : i32
    %c0_i32_0 = arith.constant 0 : i32
    %c0_i32_1 = arith.constant 0 : i32
    return %c0_i32, %c0_i32_0 : i32, i32
  }
  func.func @transform_10(%arg0: i32, %arg1: i32) -> (i32, i32) {
    %c0_i32 = arith.constant 0 : i32
    %c0_i32_0 = arith.constant 0 : i32
    %c0_i32_1 = arith.constant 0 : i32
    return %c0_i32, %c0_i32_0 : i32, i32
  }
  func.func @transform_11(%arg0: i32, %arg1: i32) -> (i32, i32, i32) {
    %c0_i32 = arith.constant 0 : i32
    %c0_i32_0 = arith.constant 0 : i32
    return %arg0, %arg1, %c0_i32 : i32, i32, i32
  }
}

</mosaic_0001>

<llo_original>
// kernel: tpu_custom_call.1
$region0: #{tpu_custom_call.1}
  #allocation0 [shape = 'u32[]', space=smem, size = 0x4, offset = 0x4, fixed_abs, tag = 'smem constant byte address 0x4 - core index']
  #allocation1 [shape = 'u32[72,128]{1,0:T(1,128)}', space=vmem, size = 0x9000, scoped, tag = 'internal scratch']
  #allocation2 [shape = 'bf16[8,32]{1,0:T(8,128)(2,1)}', space=vmem, size = 0x800, scoped, tag = 'scratch operand']
  #allocation3 [shape = 'bf16[8,32]{1,0:T(8,128)(2,1)}', space=vmem, size = 0x800, scoped, tag = 'scratch operand']
  #allocation4 [shape = 'bf16[8,32]{1,0:T(8,128)(2,1)}', space=vmem, size = 0x800, scoped, tag = 'scratch operand']
  %s0 = inlined_call_operand.hbm [shape: bf16[2,8,32], index: 0, kind: input, shape index: {}]
  %s1 = inlined_call_operand.hbm [shape: bf16[2,8,32], index: 1, kind: input, shape index: {}]
  %s2 = inlined_call_operand.hbm [shape: bf16[2,8,32], index: 2, kind: input, shape index: {}]
  %s3 = inlined_call_operand.hbm [shape: bf16[32,32], index: 3, kind: input, shape index: {}]
  %s4 = inlined_call_operand.hbm [shape: bf16[32,32], index: 4, kind: input, shape index: {}]
  %s5 = inlined_call_operand.hbm [shape: bf16[32,32], index: 5, kind: input, shape index: {}]
  %s6 = inlined_call_operand.hbm [shape: bf16[32,32], index: 6, kind: input, shape index: {}]
  %s7 = inlined_call_operand.vmem [shape: f32[1,32], index: 7, kind: input, shape index: {}]
  %s8 = inlined_call_operand.vmem [shape: f32[1,32], index: 8, kind: input, shape index: {}]
  %s9 = inlined_call_operand.vmem [shape: f32[1,32], index: 9, kind: input, shape index: {}]
  %s10 = inlined_call_operand.vmem [shape: f32[1,32], index: 10, kind: input, shape index: {}]
  %s11 = inlined_call_operand.hbm [shape: f32[2,8,32], index: 11, kind: output, shape index: {}]
  %s12 = sld [smem:[#allocation0]]
  $region109: #{tpu_custom_call.1} parent=0
    _
  %s14 = ssub.s32 1, %s12
  %s15 = scalar_select 0, %s14, %s12
  $region1: #{tpu_custom_call.1} parent=0
    #allocation5 [shape = 'u8[4096]{0}', space=vmem, size = 0x1000, scoped, tag = 'input window, operand 0']
    #allocation6 [shape = 's32[2]{0}', space=sflag, size = 0x8, scoped, tag = 'scoped memory for tpu_custom_call.1']
    #allocation7 [shape = 's32[2]{0}', space=sflag, size = 0x8, scoped, tag = 'scoped memory for tpu_custom_call.1']
    #allocation8 [shape = 'u8[2048]{0}', space=vmem, size = 0x800, scoped, tag = 'input window, operand 1, single buffered']
    #allocation9 [shape = 's32[1]{0}', space=sflag, size = 0x4, scoped, tag = 'scoped memory for tpu_custom_call.1']
    #allocation10 [shape = 'u8[2048]{0}', space=vmem, size = 0x800, scoped, tag = 'input window, operand 2, single buffered']
    #allocation11 [shape = 'u8[8192]{0}', space=vmem, size = 0x2000, scoped, tag = 'input window, operand 3, single buffered']
    #allocation12 [shape = 's32[1]{0}', space=sflag, size = 0x4, scoped, tag = 'scoped memory for tpu_custom_call.1']
    #allocation13 [shape = 'u8[8192]{0}', space=vmem, size = 0x2000, scoped, tag = 'input window, operand 4, single buffered']
    #allocation14 [shape = 'u8[8192]{0}', space=vmem, size = 0x2000, scoped, tag = 'input window, operand 5, single buffered']
    #allocation15 [shape = 's32[1]{0}', space=sflag, size = 0x4, scoped, tag = 'scoped memory for tpu_custom_call.1']
    #allocation16 [shape = 'u8[8192]{0}', space=vmem, size = 0x2000, scoped, tag = 'input window, operand 6, single buffered']
    #allocation17 [shape = 'u8[8192]{0}', space=vmem, size = 0x2000, scoped, tag = 'output window, operand 0']
    %16 = vsyncpa [#allocation6], 0
    %s17 = scalar_lea.sflag [#allocation6], 1
    %18 = vsyncpa %s17, 0
    %19 = vsyncpa [#allocation9], 0
    %20 = vsyncpa [#allocation12], 0
    %21 = vsyncpa [#allocation15], 0
    %22 = vsyncpa [#allocation7], 0
    %s23 = scalar_lea.sflag [#allocation7], 1
    %24 = vsyncpa %s23, 0
    loop: start=0, step=1, limit=4
    $region2: #{tpu_custom_call.1} parent=1 // loop_pre_header
      _
    $region3: #{tpu_custom_call.1} parent=1 // loop_header
      %s26 = sphi 0, %s30
      %p27 = scmp.ge.s32.totalorder %s26, 4
      %s33 = sphi 0, %s45
      %s34 = sphi 0, %s41
      %s35 = sphi 0, %s33
      %s36 = sphi 0, %s34
      %s37 = sphi 0, %s35
      %s38 = sphi 0, %s36
      %s50 = sphi 0, %s52
      %s53 = sphi 0, %s50
      %s54 = sphi 0, %s53
      %s70 = sphi 0, %s54
      %s76 = sphi 0, %s78
      %s79 = sphi 0, %s76
      %s80 = sphi 0, %s79
      %s96 = sphi 0, %s80
      %s102 = sphi 0, %s104
      %s105 = sphi 0, %s102
      %s106 = sphi 0, %s105
      %s122 = sphi 0, %s106
      %s126 = sphi 0, %s126
      %s128 = sphi 0, %s126
      %s129 = sphi 0, %s128
      %s143 = sphi 0, %s129
      %s147 = sphi 0, %s147
      %s149 = sphi 0, %s147
      %s150 = sphi 0, %s149
      %s164 = sphi 0, %s150
      %s168 = sphi 0, %s168
      %s170 = sphi 0, %s168
      %s171 = sphi 0, %s170
      %s185 = sphi 0, %s171
      %s189 = sphi 0, %s189
      %s191 = sphi 0, %s189
      %s192 = sphi 0, %s191
      %s206 = sphi 0, %s192
      %s210 = sphi 0, %s210
      %s212 = sphi 0, %s210
      %s213 = sphi 0, %s212
      %s227 = sphi 0, %s213
      %s231 = sphi 0, %s231
      %s233 = sphi 0, %s231
      %s234 = sphi 0, %s233
      %s248 = sphi 0, %s234
      %s252 = sphi 0, %s252
      %s254 = sphi 0, %s252
      %s255 = sphi 0, %s254
      %s269 = sphi 0, %s255
      %s273 = sphi 0, %s273
      %s275 = sphi 0, %s273
      %s276 = sphi 0, %s275
      %s290 = sphi 0, %s276
      %s298 = sphi 0, %s300
      %s301 = sphi 0, %s298
      %s302 = sphi 0, %s301
      %s318 = sphi 0, %s302
    $region4: #{tpu_custom_call.1} parent=1 // loop_header_branch
      %29 = sbr.rel (%p27) target = $region8
    $region5: #{tpu_custom_call.1} parent=1 // loop_body
      %s31 = ssub.s32 %s26, 1
      %s32 = ssub.s32 %s26, 2
      %s39 = sadd.s32 1, %s34
      %p40 = scmp.ge.s32.totalorder %s39, 1
      %s41 = scalar_select %p40, 0, %s39
      %s42 = sadd.s32 1, %s33
      %s43 = scalar_select %p40, %s42, %s33
      %p44 = scmp.ge.s32.totalorder %s43, 2
      %s45 = scalar_select %p44, 0, %s43
      %s46 = ssub.s32 %s33, %s45
      %s47 = ssub.s32 %s34, %s41
      %s48 = sor.u32 %s46, %s47
      %p49 = scmp.eq.s32.totalorder %s48, 0
      %s51 = sadd.s32 %s50, 1
      %s52 = scalar_select %p49, %s50, %s51
      %p55 = pneg %p49
      %p56 = scmp.eq.s32.totalorder %s26, 1
      %p57 = por %p55, %p56
      %p58 = scmp.ne.s32.totalorder %s50, %s53
      %p59 = scmp.eq.s32.totalorder %s26, 0
      %p60 = por %p58, %p59
      %p61 = scmp.ne.s32.totalorder %s50, %s53
      %p62 = scmp.eq.s32.totalorder %s31, 1
      %p63 = por %p61, %p62
      %p64 = scmp.ne.s32.totalorder %s53, %s54
      %p65 = scmp.eq.s32.totalorder %s31, 0
      %p66 = por %p64, %p65
      %p67 = scmp.ne.s32.totalorder %s53, %s54
      %p68 = scmp.eq.s32.totalorder %s32, 1
      %p69 = por %p67, %p68
      %p71 = scmp.ne.s32.totalorder %s54, %s70
      %p72 = scmp.eq.s32.totalorder %s32, 0
      %p73 = por %p71, %p72
      %s74 = ssub.s32 %s33, %s45
      %p75 = scmp.eq.s32.totalorder %s74, 0
      %s77 = sadd.s32 %s76, 1
      %s78 = scalar_select %p75, %s76, %s77
      %p81 = pneg %p75
      %p82 = scmp.eq.s32.totalorder %s26, 1
      %p83 = por %p81, %p82
      %p84 = scmp.ne.s32.totalorder %s76, %s79
      %p85 = scmp.eq.s32.totalorder %s26, 0
      %p86 = por %p84, %p85
      %p87 = scmp.ne.s32.totalorder %s76, %s79
      %p88 = scmp.eq.s32.totalorder %s31, 1
      %p89 = por %p87, %p88
      %p90 = scmp.ne.s32.totalorder %s79, %s80
      %p91 = scmp.eq.s32.totalorder %s31, 0
      %p92 = por %p90, %p91
      %p93 = scmp.ne.s32.totalorder %s79, %s80
      %p94 = scmp.eq.s32.totalorder %s32, 1
      %p95 = por %p93, %p94
      %p97 = scmp.ne.s32.totalorder %s80, %s96
      %p98 = scmp.eq.s32.totalorder %s32, 0
      %p99 = por %p97, %p98
      %s100 = ssub.s32 %s33, %s45
      %p101 = scmp.eq.s32.totalorder %s100, 0
      %s103 = sadd.s32 %s102, 1
      %s104 = scalar_select %p101, %s102, %s103
      %p107 = pneg %p101
      %p108 = scmp.eq.s32.totalorder %s26, 1
      %p109 = por %p107, %p108
      %p110 = scmp.ne.s32.totalorder %s102, %s105
      %p111 = scmp.eq.s32.totalorder %s26, 0
      %p112 = por %p110, %p111
      %p113 = scmp.ne.s32.totalorder %s102, %s105
      %p114 = scmp.eq.s32.totalorder %s31, 1
      %p115 = por %p113, %p114
      %p116 = scmp.ne.s32.totalorder %s105, %s106
      %p117 = scmp.eq.s32.totalorder %s31, 0
      %p118 = por %p116, %p117
      %p119 = scmp.ne.s32.totalorder %s105, %s106
      %p120 = scmp.eq.s32.totalorder %s32, 1
      %p121 = por %p119, %p120
      %p123 = scmp.ne.s32.totalorder %s106, %s122
      %p124 = scmp.eq.s32.totalorder %s32, 0
      %p125 = por %p123, %p124
      %s127 = sadd.s32 %s126, 1
      %p130 = scmp.eq.s32.totalorder %s26, 1
      %p131 = scmp.ne.s32.totalorder %s126, %s128
      %p132 = scmp.eq.s32.totalorder %s26, 0
      %p133 = por %p131, %p132
      %p134 = scmp.ne.s32.totalorder %s126, %s128
      %p135 = scmp.eq.s32.totalorder %s31, 1
      %p136 = por %p134, %p135
      %p137 = scmp.ne.s32.totalorder %s128, %s129
      %p138 = scmp.eq.s32.totalorder %s31, 0
      %p139 = por %p137, %p138
      %p140 = scmp.ne.s32.totalorder %s128, %s129
      %p141 = scmp.eq.s32.totalorder %s32, 1
      %p142 = por %p140, %p141
      %p144 = scmp.ne.s32.totalorder %s129, %s143
      %p145 = scmp.eq.s32.totalorder %s32, 0
      %p146 = por %p144, %p145
      %s148 = sadd.s32 %s147, 1
      %p151 = scmp.eq.s32.totalorder %s26, 1
      %p152 = scmp.ne.s32.totalorder %s147, %s149
      %p153 = scmp.eq.s32.totalorder %s26, 0
      %p154 = por %p152, %p153
      %p155 = scmp.ne.s32.totalorder %s147, %s149
      %p156 = scmp.eq.s32.totalorder %s31, 1
      %p157 = por %p155, %p156
      %p158 = scmp.ne.s32.totalorder %s149, %s150
      %p159 = scmp.eq.s32.totalorder %s31, 0
      %p160 = por %p158, %p159
      %p161 = scmp.ne.s32.totalorder %s149, %s150
      %p162 = scmp.eq.s32.totalorder %s32, 1
      %p163 = por %p161, %p162
      %p165 = scmp.ne.s32.totalorder %s150, %s164
      %p166 = scmp.eq.s32.totalorder %s32, 0
      %p167 = por %p165, %p166
      %s169 = sadd.s32 %s168, 1
      %p172 = scmp.eq.s32.totalorder %s26, 1
      %p173 = scmp.ne.s32.totalorder %s168, %s170
      %p174 = scmp.eq.s32.totalorder %s26, 0
      %p175 = por %p173, %p174
      %p176 = scmp.ne.s32.totalorder %s168, %s170
      %p177 = scmp.eq.s32.totalorder %s31, 1
      %p178 = por %p176, %p177
      %p179 = scmp.ne.s32.totalorder %s170, %s171
      %p180 = scmp.eq.s32.totalorder %s31, 0
      %p181 = por %p179, %p180
      %p182 = scmp.ne.s32.totalorder %s170, %s171
      %p183 = scmp.eq.s32.totalorder %s32, 1
      %p184 = por %p182, %p183
      %p186 = scmp.ne.s32.totalorder %s171, %s185
      %p187 = scmp.eq.s32.totalorder %s32, 0
      %p188 = por %p186, %p187
      %s190 = sadd.s32 %s189, 1
      %p193 = scmp.eq.s32.totalorder %s26, 1
      %p194 = scmp.ne.s32.totalorder %s189, %s191
      %p195 = scmp.eq.s32.totalorder %s26, 0
      %p196 = por %p194, %p195
      %p197 = scmp.ne.s32.totalorder %s189, %s191
      %p198 = scmp.eq.s32.totalorder %s31, 1
      %p199 = por %p197, %p198
      %p200 = scmp.ne.s32.totalorder %s191, %s192
      %p201 = scmp.eq.s32.totalorder %s31, 0
      %p202 = por %p200, %p201
      %p203 = scmp.ne.s32.totalorder %s191, %s192
      %p204 = scmp.eq.s32.totalorder %s32, 1
      %p205 = por %p203, %p204
      %p207 = scmp.ne.s32.totalorder %s192, %s206
      %p208 = scmp.eq.s32.totalorder %s32, 0
      %p209 = por %p207, %p208
      %s211 = sadd.s32 %s210, 1
      %p214 = scmp.eq.s32.totalorder %s26, 1
      %p215 = scmp.ne.s32.totalorder %s210, %s212
      %p216 = scmp.eq.s32.totalorder %s26, 0
      %p217 = por %p215, %p216
      %p218 = scmp.ne.s32.totalorder %s210, %s212
      %p219 = scmp.eq.s32.totalorder %s31, 1
      %p220 = por %p218, %p219
      %p221 = scmp.ne.s32.totalorder %s212, %s213
      %p222 = scmp.eq.s32.totalorder %s31, 0
      %p223 = por %p221, %p222
      %p224 = scmp.ne.s32.totalorder %s212, %s213
      %p225 = scmp.eq.s32.totalorder %s32, 1
      %p226 = por %p224, %p225
      %p228 = scmp.ne.s32.totalorder %s213, %s227
      %p229 = scmp.eq.s32.totalorder %s32, 0
      %p230 = por %p228, %p229
      %s232 = sadd.s32 %s231, 1
      %p235 = scmp.eq.s32.totalorder %s26, 1
      %p236 = scmp.ne.s32.totalorder %s231, %s233
      %p237 = scmp.eq.s32.totalorder %s26, 0
      %p238 = por %p236, %p237
      %p239 = scmp.ne.s32.totalorder %s231, %s233
      %p240 = scmp.eq.s32.totalorder %s31, 1
      %p241 = por %p239, %p240
      %p242 = scmp.ne.s32.totalorder %s233, %s234
      %p243 = scmp.eq.s32.totalorder %s31, 0
      %p244 = por %p242, %p243
      %p245 = scmp.ne.s32.totalorder %s233, %s234
      %p246 = scmp.eq.s32.totalorder %s32, 1
      %p247 = por %p245, %p246
      %p249 = scmp.ne.s32.totalorder %s234, %s248
      %p250 = scmp.eq.s32.totalorder %s32, 0
      %p251 = por %p249, %p250
      %s253 = sadd.s32 %s252, 1
      %p256 = scmp.eq.s32.totalorder %s26, 1
      %p257 = scmp.ne.s32.totalorder %s252, %s254
      %p258 = scmp.eq.s32.totalorder %s26, 0
      %p259 = por %p257, %p258
      %p260 = scmp.ne.s32.totalorder %s252, %s254
      %p261 = scmp.eq.s32.totalorder %s31, 1
      %p262 = por %p260, %p261
      %p263 = scmp.ne.s32.totalorder %s254, %s255
      %p264 = scmp.eq.s32.totalorder %s31, 0
      %p265 = por %p263, %p264
      %p266 = scmp.ne.s32.totalorder %s254, %s255
      %p267 = scmp.eq.s32.totalorder %s32, 1
      %p268 = por %p266, %p267
      %p270 = scmp.ne.s32.totalorder %s255, %s269
      %p271 = scmp.eq.s32.totalorder %s32, 0
      %p272 = por %p270, %p271
      %s274 = sadd.s32 %s273, 1
      %p277 = scmp.eq.s32.totalorder %s26, 1
      %p278 = scmp.ne.s32.totalorder %s273, %s275
      %p279 = scmp.eq.s32.totalorder %s26, 0
      %p280 = por %p278, %p279
      %p281 = scmp.ne.s32.totalorder %s273, %s275
      %p282 = scmp.eq.s32.totalorder %s31, 1
      %p283 = por %p281, %p282
      %p284 = scmp.ne.s32.totalorder %s275, %s276
      %p285 = scmp.eq.s32.totalorder %s31, 0
      %p286 = por %p284, %p285
      %p287 = scmp.ne.s32.totalorder %s275, %s276
      %p288 = scmp.eq.s32.totalorder %s32, 1
      %p289 = por %p287, %p288
      %p291 = scmp.ne.s32.totalorder %s276, %s290
      %p292 = scmp.eq.s32.totalorder %s32, 0
      %p293 = por %p291, %p292
      %s294 = ssub.s32 %s33, %s45
      %s295 = ssub.s32 %s34, %s41
      %s296 = sor.u32 %s294, %s295
      %p297 = scmp.eq.s32.totalorder %s296, 0
      %s299 = sadd.s32 %s298, 1
      %s300 = scalar_select %p297, %s298, %s299
      %p303 = pneg %p297
      %p304 = scmp.eq.s32.totalorder %s26, 1
      %p305 = por %p303, %p304
      %p306 = scmp.ne.s32.totalorder %s298, %s301
      %p307 = scmp.eq.s32.totalorder %s26, 0
      %p308 = por %p306, %p307
      %p309 = scmp.ne.s32.totalorder %s298, %s301
      %p310 = scmp.eq.s32.totalorder %s31, 1
      %p311 = por %p309, %p310
      %p312 = scmp.ne.s32.totalorder %s301, %s302
      %p313 = scmp.eq.s32.totalorder %s31, 0
      %p314 = por %p312, %p313
      %p315 = scmp.ne.s32.totalorder %s301, %s302
      %p316 = scmp.eq.s32.totalorder %s32, 1
      %p317 = por %p315, %p316
      %p319 = scmp.ne.s32.totalorder %s302, %s318
      %p320 = scmp.eq.s32.totalorder %s32, 0
      %p321 = por %p319, %p320
      %p322 = scmp.le.s32.totalorder 1, %s26
      %p323 = scmp.lt.s32.totalorder %s26, 3
      %p324 = pnand %p322, %p323
      %p325 = pneg %p324
      // Predicated region
      $region9: #{tpu_custom_call.1} parent=5 // pred_check
        _
      $region10: #{tpu_custom_call.1} parent=5 // pred_check_branch
        %327 = sbr.rel (%p324) target = $region12
      $region11: #{tpu_custom_call.1} parent=5 // pred_region
        %s328 = ssub.s32 %s26, 1
        // Predicated region
        $region13: #{tpu_custom_call.1} parent=11 // pred_check
          %p329 = pneg %p92
        $region14: #{tpu_custom_call.1} parent=11 // pred_check_branch
          %331 = sbr.rel (%p329) target = $region16
        $region15: #{tpu_custom_call.1} parent=11 // pred_region
          %333 = vsyncadd [#allocation9], 0
          %s334 = smul.addr %s35, 4
          %s335 = scalar_lea.hbm %s1, %s334
          %s337 = sshll.u32 %s335, 4
          %s338 = int_to_ptr.hbm [resolvable:$true] %s337
          %s339 = sshll.u32 [#allocation8], 4
          %s340 = int_to_ptr.vmem [resolvable:$true] %s339
          %342 = dma.hbm_to_vmem [thread:$0]  %s338, 64, %s340, [#allocation9]
        $region16: #{tpu_custom_call.1} parent=11 // pred_fallthru
          _
        // Predicated region
        $region17: #{tpu_custom_call.1} parent=11 // pred_check
          %p343 = pneg %p118
        $region18: #{tpu_custom_call.1} parent=11 // pred_check_branch
          %345 = sbr.rel (%p343) target = $region20
        $region19: #{tpu_custom_call.1} parent=11 // pred_region
          %347 = vsyncadd [#allocation9], 0
          %s348 = smul.addr %s35, 4
          %s349 = scalar_lea.hbm %s2, %s348
          %s351 = sshll.u32 %s349, 4
          %s352 = int_to_ptr.hbm [resolvable:$true] %s351
          %s353 = sshll.u32 [#allocation10], 4
          %s354 = int_to_ptr.vmem [resolvable:$true] %s353
          %356 = dma.hbm_to_vmem [thread:$0]  %s352, 64, %s354, [#allocation9]
        $region20: #{tpu_custom_call.1} parent=11 // pred_fallthru
          _
        // Predicated region
        $region21: #{tpu_custom_call.1} parent=11 // pred_check
          %p357 = pneg %p139
        $region22: #{tpu_custom_call.1} parent=11 // pred_check_branch
          %359 = sbr.rel (%p357) target = $region24
        $region23: #{tpu_custom_call.1} parent=11 // pred_region
          %361 = vsyncadd [#allocation12], 0
          %s362 = sshll.u32 %s3, 4
          %s363 = int_to_ptr.hbm [resolvable:$true] %s362
          %s364 = sshll.u32 [#allocation11], 4
          %s365 = int_to_ptr.vmem [resolvable:$true] %s364
          %370 = dma.hbm_to_vmem [thread:$0]  %s363, 256, %s365, [#allocation12], 64, 64, 4
        $region24: #{tpu_custom_call.1} parent=11 // pred_fallthru
          _
        // Predicated region
        $region25: #{tpu_custom_call.1} parent=11 // pred_check
          %p371 = pneg %p160
        $region26: #{tpu_custom_call.1} parent=11 // pred_check_branch
          %373 = sbr.rel (%p371) target = $region28
        $region27: #{tpu_custom_call.1} parent=11 // pred_region
          %375 = vsyncadd [#allocation12], 0
          %s376 = sshll.u32 %s4, 4
          %s377 = int_to_ptr.hbm [resolvable:$true] %s376
          %s378 = sshll.u32 [#allocation13], 4
          %s379 = int_to_ptr.vmem [resolvable:$true] %s378
          %384 = dma.hbm_to_vmem [thread:$0]  %s377, 256, %s379, [#allocation12], 64, 64, 4
        $region28: #{tpu_custom_call.1} parent=11 // pred_fallthru
          _
        // Predicated region
        $region29: #{tpu_custom_call.1} parent=11 // pred_check
          %p385 = pneg %p181
        $region30: #{tpu_custom_call.1} parent=11 // pred_check_branch
          %387 = sbr.rel (%p385) target = $region32
        $region31: #{tpu_custom_call.1} parent=11 // pred_region
          %389 = vsyncadd [#allocation15], 0
          %s390 = sshll.u32 %s5, 4
          %s391 = int_to_ptr.hbm [resolvable:$true] %s390
          %s392 = sshll.u32 [#allocation14], 4
          %s393 = int_to_ptr.vmem [resolvable:$true] %s392
          %398 = dma.hbm_to_vmem [thread:$0]  %s391, 256, %s393, [#allocation15], 64, 64, 4
        $region32: #{tpu_custom_call.1} parent=11 // pred_fallthru
          _
        // Predicated region
        $region33: #{tpu_custom_call.1} parent=11 // pred_check
          %p399 = pneg %p202
        $region34: #{tpu_custom_call.1} parent=11 // pred_check_branch
          %401 = sbr.rel (%p399) target = $region36
        $region35: #{tpu_custom_call.1} parent=11 // pred_region
          %403 = vsyncadd [#allocation15], 0
          %s404 = sshll.u32 %s6, 4
          %s405 = int_to_ptr.hbm [resolvable:$true] %s404
          %s406 = sshll.u32 [#allocation16], 4
          %s407 = int_to_ptr.vmem [resolvable:$true] %s406
          %412 = dma.hbm_to_vmem [thread:$0]  %s405, 256, %s407, [#allocation15], 64, 64, 4
        $region36: #{tpu_custom_call.1} parent=11 // pred_fallthru
          _
        // Predicated region
        $region37: #{tpu_custom_call.1} parent=11 // pred_check
          %p413 = pneg %p223
        $region38: #{tpu_custom_call.1} parent=11 // pred_check_branch
          %415 = sbr.rel (%p413) target = $region40
        $region39: #{tpu_custom_call.1} parent=11 // pred_region
          _
        $region40: #{tpu_custom_call.1} parent=11 // pred_fallthru
          _
        // Predicated region
        $region41: #{tpu_custom_call.1} parent=11 // pred_check
          %p416 = pneg %p244
        $region42: #{tpu_custom_call.1} parent=11 // pred_check_branch
          %418 = sbr.rel (%p416) target = $region44
        $region43: #{tpu_custom_call.1} parent=11 // pred_region
          _
        $region44: #{tpu_custom_call.1} parent=11 // pred_fallthru
          _
        // Predicated region
        $region45: #{tpu_custom_call.1} parent=11 // pred_check
          %p419 = pneg %p265
        $region46: #{tpu_custom_call.1} parent=11 // pred_check_branch
          %421 = sbr.rel (%p419) target = $region48
        $region47: #{tpu_custom_call.1} parent=11 // pred_region
          _
        $region48: #{tpu_custom_call.1} parent=11 // pred_fallthru
          _
        // Predicated region
        $region49: #{tpu_custom_call.1} parent=11 // pred_check
          %p422 = pneg %p286
        $region50: #{tpu_custom_call.1} parent=11 // pred_check_branch
          %424 = sbr.rel (%p422) target = $region52
        $region51: #{tpu_custom_call.1} parent=11 // pred_region
          _
        $region52: #{tpu_custom_call.1} parent=11 // pred_fallthru
          _
      $region12: #{tpu_custom_call.1} parent=5 // pred_fallthru
        _
      %p425 = scmp.lt.s32.totalorder %s26, 2
      // Predicated region
      $region53: #{tpu_custom_call.1} parent=5 // pred_check
        %p426 = pneg %p425
      $region54: #{tpu_custom_call.1} parent=5 // pred_check_branch
        %428 = sbr.rel (%p426) target = $region56
      $region55: #{tpu_custom_call.1} parent=5 // pred_region
        // Predicated region
        $region57: #{tpu_custom_call.1} parent=55 // pred_check
          %p429 = pneg %p60
        $region58: #{tpu_custom_call.1} parent=55 // pred_check_branch
          %431 = sbr.rel (%p429) target = $region60
        $region59: #{tpu_custom_call.1} parent=55 // pred_region
          %s432 = sand.u32 %s50, 1
          %s433 = scalar_lea.sflag [#allocation6], %s432
          %s434 = sand.u32 %s50, 1
          %s435 = smul.addr %s434, 4
          %s436 = scalar_lea.vmem [#allocation5], %s435
          %438 = vsyncadd %s433, 0
          %s439 = sadd.s32 %s34, %s33
          %s440 = smul.addr %s439, 4
          %s441 = scalar_lea.hbm %s0, %s440
          %s443 = sshll.u32 %s441, 4
          %s444 = int_to_ptr.hbm [resolvable:$true] %s443
          %s445 = sshll.u32 %s436, 4
          %s446 = int_to_ptr.vmem [resolvable:$true] %s445
          %448 = dma.hbm_to_vmem [thread:$0]  %s444, 64, %s446, %s433
        $region60: #{tpu_custom_call.1} parent=55 // pred_fallthru
          _
      $region56: #{tpu_custom_call.1} parent=5 // pred_fallthru
        _
      %p449 = scmp.le.s32.totalorder 1, %s26
      %p450 = scmp.lt.s32.totalorder %s26, 3
      %p451 = pnand %p449, %p450
      %p452 = pneg %p451
      // Predicated region
      $region61: #{tpu_custom_call.1} parent=5 // pred_check
        _
      $region62: #{tpu_custom_call.1} parent=5 // pred_check_branch
        %454 = sbr.rel (%p451) target = $region64
      $region63: #{tpu_custom_call.1} parent=5 // pred_region
        %s455 = ssub.s32 %s26, 1
        %s456 = sand.u32 %s53, 1
        %s457 = scalar_lea.sflag [#allocation6], %s456
        %s458 = sand.u32 %s53, 1
        %s459 = smul.addr %s458, 4
        %s460 = scalar_lea.vmem [#allocation5], %s459
        // Predicated region
        $region65: #{tpu_custom_call.1} parent=63 // pred_check
          %p461 = pneg %p66
        $region66: #{tpu_custom_call.1} parent=63 // pred_check_branch
          %463 = sbr.rel (%p461) target = $region68
        $region67: #{tpu_custom_call.1} parent=63 // pred_region
          %465 = dma.done %s457, 64
        $region68: #{tpu_custom_call.1} parent=63 // pred_fallthru
          _
        // Predicated region
        $region69: #{tpu_custom_call.1} parent=63 // pred_check
          %p466 = pneg %p92
        $region70: #{tpu_custom_call.1} parent=63 // pred_check_branch
          %468 = sbr.rel (%p466) target = $region72
        $region71: #{tpu_custom_call.1} parent=63 // pred_region
          %470 = dma.done [#allocation9], 64
        $region72: #{tpu_custom_call.1} parent=63 // pred_fallthru
          _
        // Predicated region
        $region73: #{tpu_custom_call.1} parent=63 // pred_check
          %p471 = pneg %p118
        $region74: #{tpu_custom_call.1} parent=63 // pred_check_branch
          %473 = sbr.rel (%p471) target = $region76
        $region75: #{tpu_custom_call.1} parent=63 // pred_region
          %475 = dma.done [#allocation9], 64
        $region76: #{tpu_custom_call.1} parent=63 // pred_fallthru
          _
        // Predicated region
        $region77: #{tpu_custom_call.1} parent=63 // pred_check
          %p476 = pneg %p139
        $region78: #{tpu_custom_call.1} parent=63 // pred_check_branch
          %478 = sbr.rel (%p476) target = $region80
        $region79: #{tpu_custom_call.1} parent=63 // pred_region
          %480 = dma.done [#allocation12], 256
        $region80: #{tpu_custom_call.1} parent=63 // pred_fallthru
          _
        // Predicated region
        $region81: #{tpu_custom_call.1} parent=63 // pred_check
          %p481 = pneg %p160
        $region82: #{tpu_custom_call.1} parent=63 // pred_check_branch
          %483 = sbr.rel (%p481) target = $region84
        $region83: #{tpu_custom_call.1} parent=63 // pred_region
          %485 = dma.done [#allocation12], 256
        $region84: #{tpu_custom_call.1} parent=63 // pred_fallthru
          _
        // Predicated region
        $region85: #{tpu_custom_call.1} parent=63 // pred_check
          %p486 = pneg %p181
        $region86: #{tpu_custom_call.1} parent=63 // pred_check_branch
          %488 = sbr.rel (%p486) target = $region88
        $region87: #{tpu_custom_call.1} parent=63 // pred_region
          %490 = dma.done [#allocation15], 256
        $region88: #{tpu_custom_call.1} parent=63 // pred_fallthru
          _
        // Predicated region
        $region89: #{tpu_custom_call.1} parent=63 // pred_check
          %p491 = pneg %p202
        $region90: #{tpu_custom_call.1} parent=63 // pred_check_branch
          %493 = sbr.rel (%p491) target = $region92
        $region91: #{tpu_custom_call.1} parent=63 // pred_region
          %495 = dma.done [#allocation15], 256
        $region92: #{tpu_custom_call.1} parent=63 // pred_fallthru
          _
        %s496 = sand.u32 %s53, 1
        %s497 = scalar_lea.sflag [#allocation6], %s496
        %s498 = sand.u32 %s53, 1
        %s499 = smul.addr %s498, 4
        %s500 = scalar_lea.vmem [#allocation5], %s499
        %p501 = pneg %p66
        %p502 = pneg %p63
        %p503 = pneg %p92
        %p504 = pneg %p89
        %p505 = pneg %p118
        %p506 = pneg %p115
        %p507 = pneg %p139
        %p508 = pneg %p136
        %p509 = pneg %p160
        %p510 = pneg %p157
        %p511 = pneg %p181
        %p512 = pneg %p178
        %p513 = pneg %p202
        %p514 = pneg %p199
        %p515 = pneg %p223
        %p516 = pneg %p220
        %p517 = pneg %p244
        %p518 = pneg %p241
        %p519 = pneg %p265
        %p520 = pneg %p262
        %p521 = pneg %p286
        %p522 = pneg %p283
        %p523 = pneg %p314
        %p524 = pneg %p311
        %s525 = sand.u32 %s301, 1
        %s526 = scalar_lea.sflag [#allocation7], %s525
        %s527 = sand.u32 %s301, 1
        %s528 = smul.addr %s527, 8
        %s529 = scalar_lea.vmem [#allocation17], %s528
        %p531 = scmp.eq.s32.totalorder %s36, 0
        // Predicated region
        $region93: #{tpu_custom_call.1} parent=63 // pred_check
          %p532 = pneg %p531
        $region94: #{tpu_custom_call.1} parent=63 // pred_check_branch
          %534 = sbr.rel (%p532) target = $region96
        $region95: #{tpu_custom_call.1} parent=63 // pred_region
          %v535 = vld [vmem:[#allocation8] sm:$0xf]
          %v536 = vld [vmem:[#allocation13] sm:$0xf]
          %v537 = vld [vmem:[#allocation13 + $0x4] sm:$0xf]
          %v538 = vld [vmem:[#allocation13 + $0x8] sm:$0xf]
          %v539 = vld [vmem:[#allocation13 + $0xc] sm:$0xf]
          %v540 = vld [vmem:[%s8] sm:$0x1]
          %v542 = vperm.slane %v540, 0
          %v548 = vunpack.c.l.b16 %v536
          %v549 = vunpack.c.l.b16 %v537
          %v550 = vunpack.c.l.b16 %v538
          %v551 = vunpack.c.l.b16 %v539
          %v552 = vpack.c.b16 %v549, %v548
          %v553 = vpack.c.b16 %v551, %v550
          %vm556 = vcmask 261120
          %v558 = vsel %vm556, %v535, 0
          %560 = vmatpush.bf16.msra.mxu0 0
          %561 = vmatpush.bf16.msra.mxu0 0
          %562 = vmatpush.bf16.msra.mxu0 0
          %563 = vmatpush.bf16.msra.mxu0 0
          %564 = vmatpush.bf16.msra.mxu0 0
          %565 = vmatpush.bf16.msra.mxu0 0
          %566 = vmatpush.bf16.msra.mxu0 %v553
          %567 = vmatpush.bf16.msra.mxu0 %v552
          %568 = vmatmul.bf16.gmra.mxu0 %v558
          %v569 = vpop.f32.mrf.mxu0
          %v570 = vadd.f32 %v542, %v569
          %v571 = vpop.f32.mrf.mxu0
          %572 = vdwg.mxu0
          %v573 = vpack.c.bf16 %v570, %v570
          %vm574 = vcmask 257024
          %575 = vst.msk [vmem:[#allocation2] sm:$0xf] %vm574, %v573
          %v576 = vld [vmem:[#allocation10] sm:$0xf]
          %v577 = vld [vmem:[#allocation14] sm:$0xf]
          %v578 = vld [vmem:[#allocation14 + $0x4] sm:$0xf]
          %v579 = vld [vmem:[#allocation14 + $0x8] sm:$0xf]
          %v580 = vld [vmem:[#allocation14 + $0xc] sm:$0xf]
          %v581 = vld [vmem:[%s9] sm:$0x1]
          %v583 = vperm.slane %v581, 0
          %v589 = vunpack.c.l.b16 %v577
          %v590 = vunpack.c.l.b16 %v578
          %v591 = vunpack.c.l.b16 %v579
          %v592 = vunpack.c.l.b16 %v580
          %v593 = vpack.c.b16 %v590, %v589
          %v594 = vpack.c.b16 %v592, %v591
          %v598 = vsel %vm556, %v576, 0
          %600 = vmatpush.bf16.msra.mxu0 0
          %601 = vmatpush.bf16.msra.mxu0 0
          %602 = vmatpush.bf16.msra.mxu0 0
          %603 = vmatpush.bf16.msra.mxu0 0
          %604 = vmatpush.bf16.msra.mxu0 0
          %605 = vmatpush.bf16.msra.mxu0 0
          %606 = vmatpush.bf16.msra.mxu0 %v594
          %607 = vmatpush.bf16.msra.mxu0 %v593
          %608 = vmatmul.bf16.gmra.mxu0 %v598
          %v609 = vpop.f32.mrf.mxu0
          %v610 = vadd.f32 %v583, %v609
          %v611 = vpop.f32.mrf.mxu0
          %612 = vdwg.mxu0
          %v613 = vpack.c.bf16 %v610, %v610
          %614 = vst.msk [vmem:[#allocation3] sm:$0xf] %vm574, %v613
        $region96: #{tpu_custom_call.1} parent=63 // pred_fallthru
          _
        %v615 = vld [vmem:[%s460] sm:$0xf]
        %v616 = vld [vmem:[#allocation11] sm:$0xf]
        %v617 = vld [vmem:[#allocation11 + $0x4] sm:$0xf]
        %v618 = vld [vmem:[#allocation11 + $0x8] sm:$0xf]
        %v619 = vld [vmem:[#allocation11 + $0xc] sm:$0xf]
        %v620 = vld [vmem:[%s7] sm:$0x1]
        %v622 = vperm.slane %v620, 0
        %v628 = vunpack.c.l.b16 %v616
        %v629 = vunpack.c.l.b16 %v617
        %v630 = vunpack.c.l.b16 %v618
        %v631 = vunpack.c.l.b16 %v619
        %v632 = vpack.c.b16 %v629, %v628
        %v633 = vpack.c.b16 %v631, %v630
        %vm636 = vcmask 261120
        %v638 = vsel %vm636, %v615, 0
        %640 = vmatpush.bf16.msra.mxu0 0
        %641 = vmatpush.bf16.msra.mxu0 0
        %642 = vmatpush.bf16.msra.mxu0 0
        %643 = vmatpush.bf16.msra.mxu0 0
        %644 = vmatpush.bf16.msra.mxu0 0
        %645 = vmatpush.bf16.msra.mxu0 0
        %646 = vmatpush.bf16.msra.mxu0 %v633
        %647 = vmatpush.bf16.msra.mxu0 %v632
        %648 = vmatmul.bf16.gmra.mxu0 %v638
        %v649 = vpop.f32.mrf.mxu0
        %v650 = vadd.f32 %v622, %v649
        %v651 = vpop.f32.mrf.mxu0
        %652 = vdwg.mxu0
        %v653 = vpack.c.bf16 %v650, %v650
        %v654 = vld [vmem:[#allocation2] sm:$0xf]
        %v655 = vld [vmem:[#allocation3] sm:$0xf]
        %vm656 = vcmask 64512
        %v658 = vsel %vm656, %v653, 0
        %v661 = vsel %vm656, %v654, 0
        %663 = vmatpush.bf16.xpose.msra.mxu0 0
        %664 = vmatpush.bf16.xpose.msra.mxu0 0
        %665 = vmatpush.bf16.xpose.msra.mxu0 0
        %666 = vmatpush.bf16.xpose.msra.mxu0 0
        %667 = vmatpush.bf16.xpose.msra.mxu0 0
        %668 = vmatpush.bf16.xpose.msra.mxu0 0
        %669 = vmatpush.bf16.xpose.msra.mxu0 0
        %670 = vmatpush.bf16.xpose.msra.mxu0 %v661
        %671 = vmatmul.bf16.gmra.mxu0 %v658
        %v672 = vpop.f32.mrf.mxu0
        %v673 = vadd.f32 0.0, %v672
        %v674 = vpop.f32.mrf.mxu0
        %675 = vdwg.mxu0
        %v676 = vsel %vm656, %v673, -inf
        %677 = vmax.xlane.f32.xlu0 %v676
        %v678 = vpop.xlane.xlu0 %677
        %v679 = vsub.f32 %v673, %v678
        %v680 = vmul.f32 %v679, 1.442695
        %v681 = vpow.pop %v680
        %v682 = vsel %vm656, %v681, 0.0
        %683 = vadd.xlane.f32.xlu0 %v682
        %v684 = vpop.xlane.xlu0 %683
        %v685 = vrcp.pop %v684
        %v686 = vmul.f32 %v681, %v685
        %v687 = vpack.c.bf16 %v686, %v686
        %v689 = vsel %vm656, %v687, 0
        %vm691 = vcmask 1043456
        %v693 = vsel %vm691, %v655, 0
        %695 = vmatpush.bf16.msra.mxu0 0
        %696 = vmatpush.bf16.msra.mxu0 0
        %697 = vmatpush.bf16.msra.mxu0 0
        %698 = vmatpush.bf16.msra.mxu0 0
        %699 = vmatpush.bf16.msra.mxu0 0
        %700 = vmatpush.bf16.msra.mxu0 0
        %701 = vmatpush.bf16.msra.mxu0 0
        %702 = vmatpush.bf16.msra.mxu0 %v693
        %703 = vmatmul.bf16.gmra.mxu0 %v689
        %v704 = vpop.f32.mrf.mxu0
        %v705 = vadd.f32 0.0, %v704
        %v706 = vpop.f32.mrf.mxu0
        %707 = vdwg.mxu0
        %v708 = vpack.c.bf16 %v705, %v705
        %vm709 = vcmask 60416
        %710 = vst.msk [vmem:[#allocation4] sm:$0xf] %vm709, %v708
        %v712 = vunpack.c.l.b16 %v653
        %v713 = vpack.c.b16 %v712, %v712
        %714 = vrot.lane.b32.xlu0 %v713, 120
        %v715 = vpop.permute.xlu0 %714
        %v717 = vunpack.c.l.b16 %v654
        %v718 = vpack.c.b16 %v717, %v717
        %719 = vrot.lane.b32.xlu0 %v718, 120
        %v720 = vpop.permute.xlu0 %719
        %v722 = vsel %vm656, %v715, 0
        %v725 = vsel %vm656, %v720, 0
        %727 = vmatpush.bf16.xpose.msra.mxu0 0
        %728 = vmatpush.bf16.xpose.msra.mxu0 0
        %729 = vmatpush.bf16.xpose.msra.mxu0 0
        %730 = vmatpush.bf16.xpose.msra.mxu0 0
        %731 = vmatpush.bf16.xpose.msra.mxu0 0
        %732 = vmatpush.bf16.xpose.msra.mxu0 0
        %733 = vmatpush.bf16.xpose.msra.mxu0 0
        %734 = vmatpush.bf16.xpose.msra.mxu0 %v725
        %735 = vmatmul.bf16.gmra.mxu0 %v722
        %v736 = vpop.f32.mrf.mxu0
        %v737 = vadd.f32 0.0, %v736
        %v738 = vpop.f32.mrf.mxu0
        %739 = vdwg.mxu0
        %v740 = vsel %vm656, %v737, -inf
        %741 = vmax.xlane.f32.xlu0 %v740
        %v742 = vpop.xlane.xlu0 %741
        %v743 = vsub.f32 %v737, %v742
        %v744 = vmul.f32 %v743, 1.442695
        %v745 = vpow.pop %v744
        %v746 = vsel %vm656, %v745, 0.0
        %747 = vadd.xlane.f32.xlu0 %v746
        %v748 = vpop.xlane.xlu0 %747
        %v749 = vrcp.pop %v748
        %v750 = vmul.f32 %v745, %v749
        %v751 = vpack.c.bf16 %v750, %v750
        %v753 = vunpack.c.l.b16 %v655
        %v754 = vpack.c.b16 %v753, %v753
        %755 = vrot.lane.b32.xlu0 %v754, 120
        %v756 = vpop.permute.xlu0 %755
        %v758 = vsel %vm656, %v751, 0
        %v761 = vsel %vm691, %v756, 0
        %763 = vmatpush.bf16.msra.mxu0 0
        %764 = vmatpush.bf16.msra.mxu0 0
        %765 = vmatpush.bf16.msra.mxu0 0
        %766 = vmatpush.bf16.msra.mxu0 0
        %767 = vmatpush.bf16.msra.mxu0 0
        %768 = vmatpush.bf16.msra.mxu0 0
        %769 = vmatpush.bf16.msra.mxu0 0
        %770 = vmatpush.bf16.msra.mxu0 %v761
        %771 = vmatmul.bf16.gmra.mxu0 %v758
        %v772 = vpop.f32.mrf.mxu0
        %v773 = vadd.f32 0.0, %v772
        %v774 = vpop.f32.mrf.mxu0
        %775 = vdwg.mxu0
        %v776 = vpack.c.bf16 %v773, %v773
        %778 = vrot.lane.b32.xlu0 %v776, 8
        %v779 = vpop.permute.xlu0 %778
        %vm781 = vcmask 126016
        %782 = vst.msk [vmem:[#allocation4] sm:$0xf] %vm781, %v779
        %783 = vrot.lane.b32.xlu0 %v713, 112
        %v784 = vpop.permute.xlu0 %783
        %785 = vrot.lane.b32.xlu0 %v718, 112
        %v786 = vpop.permute.xlu0 %785
        %v788 = vsel %vm656, %v784, 0
        %v791 = vsel %vm656, %v786, 0
        %793 = vmatpush.bf16.xpose.msra.mxu0 0
        %794 = vmatpush.bf16.xpose.msra.mxu0 0
        %795 = vmatpush.bf16.xpose.msra.mxu0 0
        %796 = vmatpush.bf16.xpose.msra.mxu0 0
        %797 = vmatpush.bf16.xpose.msra.mxu0 0
        %798 = vmatpush.bf16.xpose.msra.mxu0 0
        %799 = vmatpush.bf16.xpose.msra.mxu0 0
        %800 = vmatpush.bf16.xpose.msra.mxu0 %v791
        %801 = vmatmul.bf16.gmra.mxu0 %v788
        %v802 = vpop.f32.mrf.mxu0
        %v803 = vadd.f32 0.0, %v802
        %v804 = vpop.f32.mrf.mxu0
        %805 = vdwg.mxu0
        %v806 = vsel %vm656, %v803, -inf
        %807 = vmax.xlane.f32.xlu0 %v806
        %v808 = vpop.xlane.xlu0 %807
        %v809 = vsub.f32 %v803, %v808
        %v810 = vmul.f32 %v809, 1.442695
        %v811 = vpow.pop %v810
        %v812 = vsel %vm656, %v811, 0.0
        %813 = vadd.xlane.f32.xlu0 %v812
        %v814 = vpop.xlane.xlu0 %813
        %v815 = vrcp.pop %v814
        %v816 = vmul.f32 %v811, %v815
        %v817 = vpack.c.bf16 %v816, %v816
        %818 = vrot.lane.b32.xlu0 %v754, 112
        %v819 = vpop.permute.xlu0 %818
        %v821 = vsel %vm656, %v817, 0
        %v824 = vsel %vm691, %v819, 0
        %826 = vmatpush.bf16.msra.mxu0 0
        %827 = vmatpush.bf16.msra.mxu0 0
        %828 = vmatpush.bf16.msra.mxu0 0
        %829 = vmatpush.bf16.msra.mxu0 0
        %830 = vmatpush.bf16.msra.mxu0 0
        %831 = vmatpush.bf16.msra.mxu0 0
        %832 = vmatpush.bf16.msra.mxu0 0
        %833 = vmatpush.bf16.msra.mxu0 %v824
        %834 = vmatmul.bf16.gmra.mxu0 %v821
        %v835 = vpop.f32.mrf.mxu0
        %v836 = vadd.f32 0.0, %v835
        %v837 = vpop.f32.mrf.mxu0
        %838 = vdwg.mxu0
        %v839 = vpack.c.bf16 %v836, %v836
        %841 = vrot.lane.b32.xlu0 %v839, 16
        %v842 = vpop.permute.xlu0 %841
        %vm844 = vcmask 191616
        %845 = vst.msk [vmem:[#allocation4] sm:$0xf] %vm844, %v842
        %846 = vrot.lane.b32.xlu0 %v713, 104
        %v847 = vpop.permute.xlu0 %846
        %848 = vrot.lane.b32.xlu0 %v718, 104
        %v849 = vpop.permute.xlu0 %848
        %v851 = vsel %vm656, %v847, 0
        %v854 = vsel %vm656, %v849, 0
        %856 = vmatpush.bf16.xpose.msra.mxu0 0
        %857 = vmatpush.bf16.xpose.msra.mxu0 0
        %858 = vmatpush.bf16.xpose.msra.mxu0 0
        %859 = vmatpush.bf16.xpose.msra.mxu0 0
        %860 = vmatpush.bf16.xpose.msra.mxu0 0
        %861 = vmatpush.bf16.xpose.msra.mxu0 0
        %862 = vmatpush.bf16.xpose.msra.mxu0 0
        %863 = vmatpush.bf16.xpose.msra.mxu0 %v854
        %864 = vmatmul.bf16.gmra.mxu0 %v851
        %v865 = vpop.f32.mrf.mxu0
        %v866 = vadd.f32 0.0, %v865
        %v867 = vpop.f32.mrf.mxu0
        %868 = vdwg.mxu0
        %v869 = vsel %vm656, %v866, -inf
        %870 = vmax.xlane.f32.xlu0 %v869
        %v871 = vpop.xlane.xlu0 %870
        %v872 = vsub.f32 %v866, %v871
        %v873 = vmul.f32 %v872, 1.442695
        %v874 = vpow.pop %v873
        %v875 = vsel %vm656, %v874, 0.0
        %876 = vadd.xlane.f32.xlu0 %v875
        %v877 = vpop.xlane.xlu0 %876
        %v878 = vrcp.pop %v877
        %v879 = vmul.f32 %v874, %v878
        %v880 = vpack.c.bf16 %v879, %v879
        %881 = vrot.lane.b32.xlu0 %v754, 104
        %v882 = vpop.permute.xlu0 %881
        %v884 = vsel %vm656, %v880, 0
        %v887 = vsel %vm691, %v882, 0
        %889 = vmatpush.bf16.msra.mxu0 0
        %890 = vmatpush.bf16.msra.mxu0 0
        %891 = vmatpush.bf16.msra.mxu0 0
        %892 = vmatpush.bf16.msra.mxu0 0
        %893 = vmatpush.bf16.msra.mxu0 0
        %894 = vmatpush.bf16.msra.mxu0 0
        %895 = vmatpush.bf16.msra.mxu0 0
        %896 = vmatpush.bf16.msra.mxu0 %v887
        %897 = vmatmul.bf16.gmra.mxu0 %v884
        %v898 = vpop.f32.mrf.mxu0
        %v899 = vadd.f32 0.0, %v898
        %v900 = vpop.f32.mrf.mxu0
        %901 = vdwg.mxu0
        %v902 = vpack.c.bf16 %v899, %v899
        %904 = vrot.lane.b32.xlu0 %v902, 24
        %v905 = vpop.permute.xlu0 %904
        %vm907 = vcmask 257216
        %908 = vst.msk [vmem:[#allocation4] sm:$0xf] %vm907, %v905
        %v909 = vld [vmem:[#allocation4] sm:$0xf]
        %v910 = vld [vmem:[#allocation16] sm:$0xf]
        %v911 = vld [vmem:[#allocation16 + $0x4] sm:$0xf]
        %v912 = vld [vmem:[#allocation16 + $0x8] sm:$0xf]
        %v913 = vld [vmem:[#allocation16 + $0xc] sm:$0xf]
        %v914 = vld [vmem:[%s10] sm:$0x1]
        %v916 = vperm.slane %v914, 0
        %v922 = vunpack.c.l.b16 %v910
        %v923 = vunpack.c.l.b16 %v911
        %v924 = vunpack.c.l.b16 %v912
        %v925 = vunpack.c.l.b16 %v913
        %v926 = vpack.c.b16 %v923, %v922
        %v927 = vpack.c.b16 %v925, %v924
        %v931 = vsel %vm636, %v909, 0
        %933 = vmatpush.bf16.msra.mxu0 0
        %934 = vmatpush.bf16.msra.mxu0 0
        %935 = vmatpush.bf16.msra.mxu0 0
        %936 = vmatpush.bf16.msra.mxu0 0
        %937 = vmatpush.bf16.msra.mxu0 0
        %938 = vmatpush.bf16.msra.mxu0 0
        %939 = vmatpush.bf16.msra.mxu0 %v927
        %940 = vmatpush.bf16.msra.mxu0 %v926
        %941 = vmatmul.bf16.gmra.mxu0 %v931
        %v942 = vpop.f32.mrf.mxu0
        %v943 = vadd.f32 %v916, %v942
        %v944 = vpop.f32.mrf.mxu0
        %945 = vdwg.mxu0
        %946 = vst.msk [vmem:[%s529] sm:$0xff] %vm636, %v943
        %s947 = sand.u32 %s301, 1
        %s948 = scalar_lea.sflag [#allocation7], %s947
        %s949 = sand.u32 %s301, 1
        %s950 = smul.addr %s949, 8
        %s951 = scalar_lea.vmem [#allocation17], %s950
        // Predicated region
        $region97: #{tpu_custom_call.1} parent=63 // pred_check
          %p952 = pneg %p311
        $region98: #{tpu_custom_call.1} parent=63 // pred_check_branch
          %954 = sbr.rel (%p952) target = $region100
        $region99: #{tpu_custom_call.1} parent=63 // pred_region
          %956 = vsyncadd %s948, 0
          %s957 = sadd.s32 %s36, %s35
          %s958 = smul.addr %s957, 8
          %s959 = scalar_lea.hbm %s11, %s958
          %s961 = sshll.u32 %s951, 4
          %s962 = int_to_ptr.vmem [resolvable:$true] %s961
          %s963 = sshll.u32 %s959, 4
          %s964 = int_to_ptr.hbm [resolvable:$true] %s963
          %966 = dma.vmem_to_hbm [thread:$0]  %s962, 128, %s964, %s948
        $region100: #{tpu_custom_call.1} parent=63 // pred_fallthru
          _
      $region64: #{tpu_custom_call.1} parent=5 // pred_fallthru
        _
      %p967 = scmp.le.s32.totalorder 2, %s26
      // Predicated region
      $region101: #{tpu_custom_call.1} parent=5 // pred_check
        %p968 = pneg %p967
      $region102: #{tpu_custom_call.1} parent=5 // pred_check_branch
        %970 = sbr.rel (%p968) target = $region104
      $region103: #{tpu_custom_call.1} parent=5 // pred_region
        %s971 = ssub.s32 %s26, 2
        // Predicated region
        $region105: #{tpu_custom_call.1} parent=103 // pred_check
          %p972 = pneg %p317
        $region106: #{tpu_custom_call.1} parent=103 // pred_check_branch
          %974 = sbr.rel (%p972) target = $region108
        $region107: #{tpu_custom_call.1} parent=103 // pred_region
          %s975 = sand.u32 %s302, 1
          %s976 = scalar_lea.sflag [#allocation7], %s975
          %s977 = sand.u32 %s302, 1
          %s978 = smul.addr %s977, 8
          %s979 = scalar_lea.vmem [#allocation17], %s978
          %981 = dma.done %s976, 128
        $region108: #{tpu_custom_call.1} parent=103 // pred_fallthru
          _
      $region104: #{tpu_custom_call.1} parent=5 // pred_fallthru
        _
    $region6: #{tpu_custom_call.1} parent=1 // loop_footer
      %s30 = sadd.s32 1, %s26
    $region7: #{tpu_custom_call.1} parent=1 // loop_footer_branch
      %25 = sbr.rel target = $region3
    $region8: #{tpu_custom_call.1} parent=1 // loop_exit
      _
    %982 = vsyncpa [#allocation6], 1
    %s983 = scalar_lea.sflag [#allocation6], 1
    %984 = vsyncpa %s983, 1
    %985 = vsyncpa [#allocation9], 1
    %986 = vsyncpa [#allocation12], 1
    %987 = vsyncpa [#allocation15], 1
    %988 = vsyncpa [#allocation7], 1
    %s989 = scalar_lea.sflag [#allocation7], 1
    %990 = vsyncpa %s989, 1

</llo_original>
